<compile_context>
chip_gen: v7x
topology: tpu7x:2x2x1
jax: 0.10.0
libtpu: 0.0.40
codegen_flags: <defaults>
</compile_context>

<pallas_src>
import functools

import jax
import jax.numpy as jnp
from jax.experimental import pallas as pl
from jax.experimental.pallas import tpu as pltpu


_TARGET_TILE_BYTES = 4 << 20  # ~4 MiB input tiles per measured roofline sweep


# ----------------------------------------------------------------------------
# Kernels
# ----------------------------------------------------------------------------

def _adain_fused_kernel(x_ref, w_ref, b_ref, o_ref, *, eps, tile_c, two_pass):
    """Single-tile path: whole H*W of `tile_c` fused channels resident in VMEM.

    x_ref/o_ref: (tile_c, HW); w_ref/b_ref: (n_pad, 1) resident across the grid.
    """
    i = pl.program_id(0)
    r0 = pl.multiple_of(i * tile_c, 8)
    gamma = w_ref[pl.ds(r0, tile_c), :]                      # (tile_c, 1) f32
    beta = b_ref[pl.ds(r0, tile_c), :]                       # (tile_c, 1) f32

    x = x_ref[...].astype(jnp.float32)                       # (tile_c, HW)
    hw = x.shape[-1]
    inv_hw = jnp.float32(1.0 / hw)
    if two_pass:
        # Numerically safe biased variance (f32 inputs; kernel is HBM-bound).
        mean = jnp.sum(x, axis=-1, keepdims=True) * inv_hw
        var = jnp.sum(jnp.square(x - mean), axis=-1, keepdims=True) * inv_hw
    else:
        # One fewer pass over the tile (bf16/f16 on v7x is near VPU-bound).
        s = jnp.sum(x, axis=-1, keepdims=True)
        ss = jnp.sum(x * x, axis=-1, keepdims=True)
        mean = s * inv_hw
        var = jnp.maximum(ss * inv_hw - mean * mean, 0.0)
    inv_std = jax.lax.rsqrt(var + eps)

    # Fused affine: y = x * scale + shift
    scale = inv_std * gamma                                   # (tile_c, 1)
    shift = beta - mean * scale                               # (tile_c, 1)
    o_ref[...] = (x * scale + shift).astype(o_ref.dtype)


def _adain_stats_kernel(x_ref, w_ref, b_ref, scale_ref, shift_ref,
                        sum_sc, ssq_sc, *, eps, hw, tile_hw, need_mask):
    """Chunked path, pass 1: per-row sum / sum-of-squares over HW tiles,
    emitting fused (scale, shift) at the last HW block."""
    j = pl.program_id(1)

    @pl.when(j == 0)
    def _():
        sum_sc[...] = jnp.zeros_like(sum_sc)
        ssq_sc[...] = jnp.zeros_like(ssq_sc)

    x = x_ref[...].astype(jnp.float32)                        # (tile_c, tile_hw)
    if need_mask:
        col = j * tile_hw + jax.lax.broadcasted_iota(jnp.int32, x.shape, 1)
        x = jnp.where(col < hw, x, 0.0)
    sum_sc[...] += jnp.sum(x, axis=-1, keepdims=True)
    ssq_sc[...] += jnp.sum(x * x, axis=-1, keepdims=True)

    @pl.when(j == pl.num_programs(1) - 1)
    def _():
        inv_hw = jnp.float32(1.0 / hw)
        mean = sum_sc[...] * inv_hw
        var = jnp.maximum(ssq_sc[...] * inv_hw - mean * mean, 0.0)
        rstd = jax.lax.rsqrt(var + eps)
        scale = rstd * w_ref[...].astype(jnp.float32)
        scale_ref[...] = scale
        shift_ref[...] = b_ref[...].astype(jnp.float32) - mean * scale


def _adain_apply_kernel(x_ref, scale_ref, shift_ref, o_ref):
    """Chunked path, pass 2: streamed y = x * scale + shift."""
    x = x_ref[...].astype(jnp.float32)
    o_ref[...] = (x * scale_ref[...] + shift_ref[...]).astype(o_ref.dtype)


# ----------------------------------------------------------------------------
# Wrapper / tiling heuristics
# ----------------------------------------------------------------------------

def _vmem_capacity_bytes():
    try:
        cap = int(getattr(pltpu.get_tpu_info(), "vmem_capacity_bytes"))
        if cap > 0:
            return cap
    except Exception:
        pass
    return 64 * 1024 * 1024  # conservative (v7x per-TC)


def _choose_tile_c(n, hw, itemsize, vmem_budget):
    """Rows per grid step for the single-tile path, or None if it can't fit."""
    # Per-row VMEM cost: double-buffered in + out tiles plus ~3 f32 temps.
    per_row = hw * (2 * itemsize + 2 * itemsize + 3 * 4)
    usable = vmem_budget - (2 << 20)
    if 8 * per_row > usable:
        return None  # whole-HW tile can't fit even at 8 rows -> chunked path
    rows = max(8, _TARGET_TILE_BYTES // max(1, hw * itemsize))
    rows = min(rows, usable // per_row)
    n_pad8 = ((n + 7) // 8) * 8
    rows = min(rows, n_pad8)
    rows = max(8, (rows // 8) * 8)
    # v7x megacore: keep >= 4 parallel grid steps when possible (>= 2 per TC).
    # Harmless on single-TC chips (tiles stay >= 1 MiB for realistic HW).
    while rows > 8 and pl.cdiv(n, rows) < 4:
        rows = max(8, ((rows // 2) // 8) * 8)
    return rows


def _adain_single_tile(x2, w2, b2, eps, tile_c, n, hw, itemsize, vmem_budget):
    num_blocks = pl.cdiv(n, tile_c)
    n_pad_wb = num_blocks * tile_c
    if n_pad_wb != n:
        # Pad ONLY the tiny per-channel params (a few KB) so the resident
        # weight/bias slice never goes out of bounds.  The big (n, HW) tensor
        # is NOT padded: Pallas handles the partial last row block (garbage
        # rows compute independently and their stores are dropped).
        pad = n_pad_wb - n
        w2 = jnp.pad(w2, ((0, pad), (0, 0)))
        b2 = jnp.pad(b2, ((0, pad), (0, 0)))

    io_tile = tile_c * hw * itemsize
    f32_tile = tile_c * hw * 4
    need = 4 * io_tile + 3 * f32_tile + 8 * n_pad_wb + (2 << 20)
    vmem_limit = int(min(max(need, 32 << 20), vmem_budget))

    two_pass = (x2.dtype == jnp.float32)
    kernel = functools.partial(_adain_fused_kernel, eps=eps, tile_c=tile_c,
                               two_pass=two_pass)
    return pl.pallas_call(
        kernel,
        out_shape=jax.ShapeDtypeStruct((n, hw), x2.dtype),
        grid=(num_blocks,),
        in_specs=[
            pl.BlockSpec((tile_c, hw), lambda i: (i, 0)),        # x rows
            pl.BlockSpec((n_pad_wb, 1), lambda i: (0, 0)),       # weight (resident)
            pl.BlockSpec((n_pad_wb, 1), lambda i: (0, 0)),       # bias   (resident)
        ],
        out_specs=pl.BlockSpec((tile_c, hw), lambda i: (i, 0)),
        compiler_params=pltpu.CompilerParams(
            dimension_semantics=("parallel",),
            vmem_limit_bytes=vmem_limit),
    )(x2, w2, b2)


def _adain_chunked(x2, w2, b2, eps, n, hw, itemsize, vmem_budget, tile_hw):
    """Large-HW fallback: stats over HW chunks, then a streamed apply kernel."""
    tile_c = 8
    if tile_hw is None:
        tile_hw = max(128, (_TARGET_TILE_BYTES // (tile_c * itemsize)) // 128 * 128)
    if tile_hw >= hw:
        tile_hw = hw
    need_mask = (hw % tile_hw) != 0
    row_blocks = pl.cdiv(n, tile_c)
    hw_blocks = pl.cdiv(hw, tile_hw)

    x_tile = tile_c * tile_hw * itemsize
    f32_tile = tile_c * tile_hw * 4

    # Pass 1: per-row stats -> fused (scale, shift).
    stats_vmem = int(min(max(2 * x_tile + 2 * f32_tile + (2 << 20), 32 << 20),
                         vmem_budget))
    scale, shift = pl.pallas_call(
        functools.partial(_adain_stats_kernel, eps=eps, hw=hw, tile_hw=tile_hw,
                          need_mask=need_mask),
        out_shape=(jax.ShapeDtypeStruct((n, 1), jnp.float32),
                   jax.ShapeDtypeStruct((n, 1), jnp.float32)),
        grid=(row_blocks, hw_blocks),
        in_specs=[
            pl.BlockSpec((tile_c, tile_hw), lambda i, j: (i, j)),   # x
            pl.BlockSpec((tile_c, 1), lambda i, j: (i, 0)),         # weight
            pl.BlockSpec((tile_c, 1), lambda i, j: (i, 0)),         # bias
        ],
        out_specs=(pl.BlockSpec((tile_c, 1), lambda i, j: (i, 0)),
                   pl.BlockSpec((tile_c, 1), lambda i, j: (i, 0))),
        scratch_shapes=[pltpu.VMEM((tile_c, 1), jnp.float32),
                        pltpu.VMEM((tile_c, 1), jnp.float32)],
        compiler_params=pltpu.CompilerParams(
            dimension_semantics=("parallel", "arbitrary"),
            vmem_limit_bytes=stats_vmem),
    )(x2, w2, b2)

    # Pass 2: y = x * scale + shift, streamed over both grid axes.
    apply_vmem = int(min(max(4 * x_tile + 2 * f32_tile + (2 << 20), 32 << 20),
                         vmem_budget))
    return pl.pallas_call(
        _adain_apply_kernel,
        out_shape=jax.ShapeDtypeStruct((n, hw), x2.dtype),
        grid=(row_blocks, hw_blocks),
        in_specs=[
            pl.BlockSpec((tile_c, tile_hw), lambda i, j: (i, j)),   # x
            pl.BlockSpec((tile_c, 1), lambda i, j: (i, 0)),         # scale
            pl.BlockSpec((tile_c, 1), lambda i, j: (i, 0)),         # shift
        ],
        out_specs=pl.BlockSpec((tile_c, tile_hw), lambda i, j: (i, j)),
        compiler_params=pltpu.CompilerParams(
            dimension_semantics=("parallel", "parallel"),
            vmem_limit_bytes=apply_vmem),
    )(x2, scale, shift)


def adaptive_instance_norm_2d(x, weight, bias, eps=1e-5, *,
                              _force_chunked=False, _tile_hw=None):
    """AdaIN forward.  x: (B, C, H, W); weight, bias: (B*C,)."""
    b, c, h, w = x.shape
    n = b * c
    hw = h * w
    assert weight.shape == (n,) and bias.shape == (n,)

    itemsize = jnp.dtype(x.dtype).itemsize
    # Generation-aware scoped-VMEM budget: ~75% of physical
    # (v5e/v6e 128 MiB -> ~96 MiB, v7x 64 MiB -> ~48 MiB).
    vmem_budget = max(32 << 20, min(int(0.75 * _vmem_capacity_bytes()), 112 << 20))

    # Lane-dense layout: one fused (b, c) channel per row, H*W in lanes.
    x2 = x.reshape(n, hw)
    w2 = weight.reshape(n, 1).astype(jnp.float32)
    b2 = bias.reshape(n, 1).astype(jnp.float32)

    tile_c = None if _force_chunked else _choose_tile_c(n, hw, itemsize, vmem_budget)
    if tile_c is not None:
        out2 = _adain_single_tile(x2, w2, b2, eps, tile_c, n, hw, itemsize,
                                  vmem_budget)
    else:
        out2 = _adain_chunked(x2, w2, b2, eps, n, hw, itemsize, vmem_budget,
                              _tile_hw)
    return out2.reshape(b, c, h, w)


# ----------------------------------------------------------------------------
# Reference & tests
# ----------------------------------------------------------------------------

def _reference(x, weight, bias, eps=1e-5):
    """Pure-JAX reference of the PyTorch forward."""
    b, c, h, w = x.shape
    xr = x.reshape(b * c, h * w).astype(jnp.float32)
    mean = jnp.mean(xr, axis=1, keepdims=True)
    var = jnp.mean(jnp.square(xr - mean), axis=1, keepdims=True)
    out = (xr - mean) * jax.lax.rsqrt(var + eps)
    out = out * weight[:, None] + bias[:, None]
    return out.reshape(b, c, h, w).astype(x.dtype)


if __name__ == "__main__":
    eps = 1e-5
    key = jax.random.PRNGKey(0)

    def check(xv, wv, bv, out, atol, rtol, name):
        ref = _reference(xv, wv, bv, eps=eps)
        assert out.shape == ref.shape, f"shape mismatch ({name})"
        assert jnp.allclose(out, ref, atol=atol, rtol=rtol), \
            f"mismatch vs reference ({name})"

    # Case 1: module-consistent small shape (B=2, C=4, 16x16) -> fused path.
    B, C, H, W = 2, 4, 16, 16
    kx, kw, kb, key = jax.random.split(key, 4)
    x = jax.random.normal(kx, (B, C, H, W), dtype=jnp.float32)
    # In MUNIT, weight/bias come per-sample from an MLP -> shape (B*C,).
    wgt = 1.0 + 0.1 * jax.random.normal(kw, (B * C,), dtype=jnp.float32)
    bs = 0.1 * jax.random.normal(kb, (B * C,), dtype=jnp.float32)
    out = jax.block_until_ready(adaptive_instance_norm_2d(x, wgt, bs, eps=eps))
    check(x, wgt, bs, out, 1e-5, 1e-5, "case 1")

    # Case 2: B*C not a multiple of 8 and HW not a multiple of 128
    # (exercises the un-padded partial last row block).
    B2, C2, H2, W2 = 1, 3, 8, 24
    kx2, kw2, kb2, key = jax.random.split(key, 4)
    x_2 = jax.random.normal(kx2, (B2, C2, H2, W2), dtype=jnp.float32)
    w_2 = 1.0 + 0.1 * jax.random.normal(kw2, (B2 * C2,), dtype=jnp.float32)
    b_2 = 0.1 * jax.random.normal(kb2, (B2 * C2,), dtype=jnp.float32)
    out2 = jax.block_until_ready(adaptive_instance_norm_2d(x_2, w_2, b_2, eps=eps))
    check(x_2, w_2, b_2, out2, 1e-5, 1e-5, "case 2")

    # Case 3: force the large-HW chunked (two-kernel) fallback on a small shape
    # with an HW tile that does not divide HW (exercises lane masking + accum).
    B3, C3, H3, W3 = 2, 3, 16, 18
    kx3, kw3, kb3, key = jax.random.split(key, 4)
    x_3 = jax.random.normal(kx3, (B3, C3, H3, W3), dtype=jnp.float32)
    w_3 = 1.0 + 0.1 * jax.random.normal(kw3, (B3 * C3,), dtype=jnp.float32)
    b_3 = 0.1 * jax.random.normal(kb3, (B3 * C3,), dtype=jnp.float32)
    out3 = jax.block_until_ready(
        adaptive_instance_norm_2d(x_3, w_3, b_3, eps=eps,
                                  _force_chunked=True, _tile_hw=128))
    check(x_3, w_3, b_3, out3, 1e-4, 1e-4, "case 3 (chunked)")

    # TODO(synk): running_mean/running_var momentum updates are a training-side
    # buffer effect of F.batch_norm and are not materialized here (they do not
    # affect the forward output with training=True).

    print("KERNEL_OK")
</pallas_src>

<mosaic_0001>
module attributes {stable_mosaic.version = 11 : i64} {
  func.func @_adain_fused_kernel(%arg0: i32, %arg1: memref<8x256xf32, #tpu.memory_space<vmem>>, %arg2: memref<8x1xf32, #tpu.memory_space<vmem>>, %arg3: memref<8x1xf32, #tpu.memory_space<vmem>>, %arg4: memref<8x256xf32, #tpu.memory_space<vmem>>) attributes {dimension_semantics = [#tpu.dimension_semantics<parallel>], iteration_bounds = array<i64: 1>, scalar_prefetch = 0 : i64, scratch_operands = 0 : i64, tpu.core_type = #tpu.core_type<tc>, window_params = [{transform_indices = @transform_0, window_bounds = array<i64: 8, 256>}, {pipeline_mode = #tpu.pipeline_mode<synchronous>, transform_indices = @transform_1, window_bounds = array<i64: 8, 1>}, {pipeline_mode = #tpu.pipeline_mode<synchronous>, transform_indices = @transform_2, window_bounds = array<i64: 8, 1>}, {transform_indices = @transform_3, window_bounds = array<i64: 8, 256>}]} {
    %c8_i32 = arith.constant 8 : i32
    %0 = arith.muli %arg0, %c8_i32 : i32
    %1 = tpu.assume_multiple %0, 8 : i32
    %2 = arith.index_cast %1 : i32 to index
    %c0 = arith.constant 0 : index
    %3 = vector.load %arg2[%2, %c0] : memref<8x1xf32, #tpu.memory_space<vmem>>, vector<8x1xf32>
    %4 = arith.index_cast %1 : i32 to index
    %c0_0 = arith.constant 0 : index
    %5 = vector.load %arg3[%4, %c0_0] : memref<8x1xf32, #tpu.memory_space<vmem>>, vector<8x1xf32>
    %c0_1 = arith.constant 0 : index
    %c0_2 = arith.constant 0 : index
    %6 = vector.load %arg1[%c0_1, %c0_2] : memref<8x256xf32, #tpu.memory_space<vmem>>, vector<8x256xf32>
    %cst = arith.constant dense<0.000000e+00> : vector<8xf32>
    %7 = vector.multi_reduction <add>, %6, %cst [1] : vector<8x256xf32> to vector<8xf32>
    %8 = vector.shape_cast %7 : vector<8xf32> to vector<8x1xf32>
    %cst_3 = arith.constant 3.906250e-03 : f32
    %9 = vector.broadcast %cst_3 : f32 to vector<8x1xf32>
    %10 = arith.mulf %8, %9 : vector<8x1xf32>
    %11 = vector.broadcast %10 : vector<8x1xf32> to vector<8x256xf32>
    %12 = arith.subf %6, %11 : vector<8x256xf32>
    %13 = arith.mulf %12, %12 : vector<8x256xf32>
    %cst_4 = arith.constant dense<0.000000e+00> : vector<8xf32>
    %14 = vector.multi_reduction <add>, %13, %cst_4 [1] : vector<8x256xf32> to vector<8xf32>
    %15 = vector.shape_cast %14 : vector<8xf32> to vector<8x1xf32>
    %cst_5 = arith.constant 3.906250e-03 : f32
    %16 = vector.broadcast %cst_5 : f32 to vector<8x1xf32>
    %17 = arith.mulf %15, %16 : vector<8x1xf32>
    %cst_6 = arith.constant 9.99999974E-6 : f32
    %18 = vector.broadcast %cst_6 : f32 to vector<8x1xf32>
    %19 = arith.addf %17, %18 : vector<8x1xf32>
    %20 = math.rsqrt %19 : vector<8x1xf32>
    %21 = arith.mulf %20, %3 : vector<8x1xf32>
    %22 = arith.mulf %10, %21 : vector<8x1xf32>
    %23 = arith.subf %5, %22 : vector<8x1xf32>
    %24 = vector.broadcast %21 : vector<8x1xf32> to vector<8x256xf32>
    %25 = arith.mulf %6, %24 : vector<8x256xf32>
    %26 = vector.broadcast %23 : vector<8x1xf32> to vector<8x256xf32>
    %27 = arith.addf %25, %26 : vector<8x256xf32>
    %c0_7 = arith.constant 0 : index
    %c0_8 = arith.constant 0 : index
    %28 = vector.load %arg4[%c0_7, %c0_8] : memref<8x256xf32, #tpu.memory_space<vmem>>, vector<8x256xf32>
    tpu.vector_store %arg4[%c0_7, %c0_8], %27 {strides = array<i32>} : memref<8x256xf32, #tpu.memory_space<vmem>>, vector<8x256xf32>,
    return
  }
  func.func @transform_0(%arg0: i32) -> (i32, i32) {
    %c0_i32 = arith.constant 0 : i32
    %c0_i32_0 = arith.constant 0 : i32
    return %arg0, %c0_i32 : i32, i32
  }
  func.func @transform_1(%arg0: i32) -> (i32, i32) {
    %c0_i32 = arith.constant 0 : i32
    %c0_i32_0 = arith.constant 0 : i32
    %c0_i32_1 = arith.constant 0 : i32
    return %c0_i32, %c0_i32_0 : i32, i32
  }
  func.func @transform_2(%arg0: i32) -> (i32, i32) {
    %c0_i32 = arith.constant 0 : i32
    %c0_i32_0 = arith.constant 0 : i32
    %c0_i32_1 = arith.constant 0 : i32
    return %c0_i32, %c0_i32_0 : i32, i32
  }
  func.func @transform_3(%arg0: i32) -> (i32, i32) {
    %c0_i32 = arith.constant 0 : i32
    %c0_i32_0 = arith.constant 0 : i32
    return %arg0, %c0_i32 : i32, i32
  }
}

</mosaic_0001>

<llo_original>
// kernel: tpu_custom_call.1
$region0: #{tpu_custom_call.1}
  #allocation0 [shape = 'u32[]', space=smem, size = 0x4, offset = 0x4, fixed_abs, tag = 'smem constant byte address 0x4 - core index']
  #allocation1 [shape = 'u32[144,128]{1,0:T(1,128)}', space=vmem, size = 0x12000, scoped, tag = 'internal scratch']
  %s0 = inlined_call_operand.vmem [shape: f32[8,256], index: 0, kind: input, shape index: {}]
  %s1 = inlined_call_operand.vmem [shape: f32[8,1], index: 1, kind: input, shape index: {}]
  %s2 = inlined_call_operand.vmem [shape: f32[8,1], index: 2, kind: input, shape index: {}]
  %s3 = inlined_call_operand.hbm [shape: f32[8,256], index: 3, kind: output, shape index: {}]
  %s4 = sld [smem:[#allocation0]]
  $region22: #{tpu_custom_call.1} parent=0
    _
  %s6 = ssub.s32 1, %s4
  %s7 = scalar_select 0, %s6, %s4
  $region1: #{tpu_custom_call.1} parent=0
    #allocation2 [shape = 'u8[8192]{0}', space=vmem, size = 0x2000, scoped, tag = 'output window, operand 0, single buffered']
    #allocation3 [shape = 's32[1]{0}', space=sflag, size = 0x4, scoped, tag = 'scoped memory for tpu_custom_call.1']
    %8 = vsyncpa [#allocation3], 0
    // Predicated region
    $region2: #{tpu_custom_call.1} parent=1 // pred_check
      _
    $region3: #{tpu_custom_call.1} parent=1 // pred_check_branch
      %10 = sbr.rel (0) target = $region5
    $region4: #{tpu_custom_call.1} parent=1 // pred_region
      _
    $region5: #{tpu_custom_call.1} parent=1 // pred_fallthru
      _
    // Predicated region
    $region6: #{tpu_custom_call.1} parent=1 // pred_check
      _
    $region7: #{tpu_custom_call.1} parent=1 // pred_check_branch
      %12 = sbr.rel (0) target = $region9
    $region8: #{tpu_custom_call.1} parent=1 // pred_region
      _
    $region9: #{tpu_custom_call.1} parent=1 // pred_fallthru
      _
    // Predicated region
    $region10: #{tpu_custom_call.1} parent=1 // pred_check
      _
    $region11: #{tpu_custom_call.1} parent=1 // pred_check_branch
      %14 = sbr.rel (0) target = $region13
    $region12: #{tpu_custom_call.1} parent=1 // pred_region
      _
    $region13: #{tpu_custom_call.1} parent=1 // pred_fallthru
      _
    %s15 = smul.u32 0, 8
    %s16 = scalar_lea.vmem %s1, %s15
    %v17 = vld [vmem:[%s16] sm:$0xff]
    %s18 = scalar_lea.vmem %s2, %s15
    %v19 = vld [vmem:[%s18] sm:$0xff]
    %v20 = vld [vmem:[%s0] sm:$0xff]
    %v21 = vld [vmem:[%s0 + $0x8] sm:$0xff]
    %v22 = vadd.f32 %v20, %v21
    %23 = vadd.xlane.f32.xlu0 %v22
    %v24 = vpop.xlane.xlu0 %23
    %v25 = vmul.f32 %v24, 0.00390625
    %v26 = vsub.f32 %v20, %v25
    %v27 = vsub.f32 %v21, %v25
    %v28 = vmul.f32 %v26, %v26
    %v29 = vmul.f32 %v27, %v27
    %v30 = vadd.f32 %v28, %v29
    %31 = vadd.xlane.f32.xlu0 %v30
    %v32 = vpop.xlane.xlu0 %31
    %v33 = vmul.f32 %v32, 0.00390625
    %v34 = vadd.f32 %v33, 1e-05
    %v35 = vrsqrt.pop %v34
    %v36 = vmul.f32 %v35, %v17
    %v37 = vmul.f32 %v25, %v36
    %v38 = vsub.f32 %v19, %v37
    %40 = vset.pattern.permute.xlu0 0
    %41 = vperm.xlu0 %40, %v36
    %v42 = vpop.permute.xlu0 %41
    %v44 = vmul.f32 %v20, %v42
    %v45 = vmul.f32 %v21, %v42
    %47 = vset.pattern.permute.xlu0 0
    %48 = vperm.xlu0 %47, %v38
    %v49 = vpop.permute.xlu0 %48
    %v51 = vadd.f32 %v44, %v49
    %v52 = vadd.f32 %v45, %v49
    %53 = vst [vmem:[#allocation2] sm:$0xff] %v51
    %54 = vst [vmem:[#allocation2 + $0x8] sm:$0xff] %v52
    // Predicated region
    $region14: #{tpu_custom_call.1} parent=1 // pred_check
      _
    $region15: #{tpu_custom_call.1} parent=1 // pred_check_branch
      %56 = sbr.rel (0) target = $region17
    $region16: #{tpu_custom_call.1} parent=1 // pred_region
      %s58 = ssub.s32 256, 256
      %59 = vsyncadd [#allocation3], %s58
      %s61 = sshll.u32 [#allocation2], 4
      %s62 = int_to_ptr.vmem [resolvable:$true] %s61
      %64 = dma.vmem_to_hbm [thread:$0]  %s62, 256, %s3, [#allocation3]
    $region17: #{tpu_custom_call.1} parent=1 // pred_fallthru
      _
    // Predicated region
    $region18: #{tpu_custom_call.1} parent=1 // pred_check
      _
    $region19: #{tpu_custom_call.1} parent=1 // pred_check_branch
      %66 = sbr.rel (0) target = $region21
    $region20: #{tpu_custom_call.1} parent=1 // pred_region
      %67 = dma.done [#allocation3], 256
    $region21: #{tpu_custom_call.1} parent=1 // pred_fallthru
      _
    %68 = vsyncpa [#allocation3], 1

</llo_original>
